<compile_context>
chip_gen: v7x
topology: tpu7x:2x2x1
jax: 0.10.0
libtpu: 0.0.40
codegen_flags: <defaults>
</compile_context>

<pallas_src>
import functools

import jax
import jax.numpy as jnp
from jax.experimental import pallas as pl
from jax.experimental.pallas import tpu as pltpu


HIDDEN = 128      # hidden width of fc1/fc2 (fixed by the module)
SUBLANE = 8       # f32 sublane height: batch tiles rounded to this
MXU_M = 256       # full MXU height on v6e/v7x; big-batch tiles align to it


def _round_up(v, m):
    return ((v + m - 1) // m) * m


@functools.lru_cache(maxsize=None)
def _is_multi_tensorcore():
    """True on chips with 2 TensorCores per device (v4 / v5p / v7x)."""
    try:
        kind = jax.devices()[0].device_kind.lower()
    except Exception:
        return False
    return any(tag in kind for tag in ("v4", "v5p", "v7"))


def _mlp_kernel(x_ref, w1_ref, b1_ref, w2_ref, b2_ref, w3_ref, b3_ref, o_ref):
    """Fused 3-layer MLP on one batch tile; all weights resident in VMEM."""
    # fc1 + ReLU in f32 (w1 is tiny: D x 128); keeps input-layer precision.
    h1 = jnp.dot(x_ref[...], w1_ref[...], preferred_element_type=jnp.float32)
    h1 = jnp.maximum(h1 + b1_ref[...], 0.0).astype(jnp.bfloat16)

    # fc2 + ReLU: bf16 MXU inputs, f32 accumulation, f32 bias/ReLU.
    h2 = jnp.dot(h1, w2_ref[...], preferred_element_type=jnp.float32)
    h2 = jnp.maximum(h2 + b2_ref[...], 0.0).astype(jnp.bfloat16)

    # fc3 logits (no activation), stored at the real n_action width.
    out = jnp.dot(h2, w3_ref[...], preferred_element_type=jnp.float32) + b3_ref[...]
    o_ref[...] = out.astype(o_ref.dtype)


def prepare_params(params):
    """One-time parameter prep (no feature padding): fc1 stays f32, fc2/fc3
    weights go to bf16 (native MXU input, halves the weight DMA); biases stay
    f32 and are added on the f32 accumulators inside the kernel."""
    return {
        "w1": params["w1"].astype(jnp.float32),
        "b1": params["b1"].astype(jnp.float32).reshape(1, -1),
        "w2": params["w2"].astype(jnp.bfloat16),
        "b2": params["b2"].astype(jnp.float32).reshape(1, -1),
        "w3": params["w3"].astype(jnp.bfloat16),
        "b3": params["b3"].astype(jnp.float32).reshape(1, -1),
    }


@functools.partial(jax.jit, static_argnames=("batch_tile",))
def reinforce_policy_forward(x, prepped, batch_tile=2048):
    """x: (B, input_dim) float32.  prepped: output of prepare_params()."""
    w1, b1 = prepped["w1"], prepped["b1"]
    w2, b2 = prepped["w2"], prepped["b2"]
    w3, b3 = prepped["w3"], prepped["b3"]

    B, D = x.shape
    A = w3.shape[1]
    multi_tc = _is_multi_tensorcore()

    big_tile = _round_up(max(int(batch_tile), MXU_M), MXU_M)

    # Tile selection (B is static under jit, so this is trace-time Python):
    #  * small batch, 1-TC chip (v5e/v6e): one full-batch block, grid == 1,
    #    zero batch padding -> one step, one DMA per operand.
    #  * small batch, 2-TC chip (v4/v5p/v7x): two balanced steps so the
    #    "parallel" axis shards across both TensorCores.
    #  * large batch: ~big_tile-row steps, load-balanced (even step count on
    #    2-TC chips); per-step compute then dwarfs the ~0.35us step overhead.
    if B <= big_tile and not (multi_tc and B >= 2 * MXU_M):
        tile = B
    else:
        n_steps = max(pl.cdiv(B, big_tile), 2 if multi_tc else 1)
        if multi_tc:
            n_steps = _round_up(n_steps, 2)
        tile = _round_up(pl.cdiv(B, n_steps), SUBLANE)
    Bp = _round_up(B, tile)
    grid = (Bp // tile,)

    # Batch rows are the only padding ever added (zeros; sliced off below).
    x_in = x if Bp == B else jnp.zeros((Bp, D), x.dtype).at[:B, :].set(x)

    flops = 2 * Bp * (D * HIDDEN + HIDDEN * HIDDEN + HIDDEN * A)
    bytes_accessed = (
        Bp * D * 4                                     # x (f32)
        + w1.size * 4 + w2.size * 2 + w3.size * 2      # weights
        + (b1.size + b2.size + b3.size) * 4            # biases
        + Bp * A * 4                                   # logits (f32)
    )

    out = pl.pallas_call(
        _mlp_kernel,
        out_shape=jax.ShapeDtypeStruct((Bp, A), jnp.float32),
        grid_spec=pltpu.PrefetchScalarGridSpec(
            num_scalar_prefetch=0,
            grid=grid,
            in_specs=[
                # batch tile of activations (full D in one block)
                pl.BlockSpec((tile, D), lambda i: (i, 0)),
                # weights / biases: grid-invariant blocks, fetched once
                pl.BlockSpec((D, HIDDEN), lambda i: (0, 0)),        # fc1 W (f32)
                pl.BlockSpec((1, HIDDEN), lambda i: (0, 0)),        # fc1 b
                pl.BlockSpec((HIDDEN, HIDDEN), lambda i: (0, 0)),   # fc2 W (bf16)
                pl.BlockSpec((1, HIDDEN), lambda i: (0, 0)),        # fc2 b
                pl.BlockSpec((HIDDEN, A), lambda i: (0, 0)),        # fc3 W (bf16)
                pl.BlockSpec((1, A), lambda i: (0, 0)),             # fc3 b
            ],
            # narrow output block: real n_action width, no padded lanes
            out_specs=pl.BlockSpec((tile, A), lambda i: (i, 0)),
        ),
        compiler_params=pltpu.CompilerParams(
            dimension_semantics=("parallel",),
        ),
        cost_estimate=pl.CostEstimate(
            flops=flops, transcendentals=0, bytes_accessed=bytes_accessed),
    )(x_in, w1, b1, w2, b2, w3, b3)

    # Strip batch padding only (there is no feature/action padding anymore).
    return out if Bp == B else out[:B]


def init_params(key, input_dim, n_action):
    """Deterministic init mimicking nn.Linear's U(-1/sqrt(fan_in), 1/sqrt(fan_in))."""
    ks = jax.random.split(key, 6)

    def linear(kw, kb, fan_in, fan_out):
        bound = 1.0 / jnp.sqrt(jnp.float32(fan_in))
        w = jax.random.uniform(kw, (fan_in, fan_out), jnp.float32, -bound, bound)
        b = jax.random.uniform(kb, (1, fan_out), jnp.float32, -bound, bound)
        return w, b

    w1, b1 = linear(ks[0], ks[1], input_dim, HIDDEN)
    w2, b2 = linear(ks[2], ks[3], HIDDEN, HIDDEN)
    w3, b3 = linear(ks[4], ks[5], HIDDEN, n_action)
    return {"w1": w1, "b1": b1, "w2": w2, "b2": b2, "w3": w3, "b3": b3}


def reference_forward(x, p):
    """Pure-JAX f32 reference of the PyTorch forward."""
    h1 = jnp.maximum(x @ p["w1"] + p["b1"], 0.0)
    h2 = jnp.maximum(h1 @ p["w2"] + p["b2"], 0.0)
    return h2 @ p["w3"] + p["b3"]


# TODO(synk): the Adam optimiser / .to(device) in __init__ are training-state
# setup, not part of the forward pass, and are intentionally not translated.

if __name__ == "__main__":
    key = jax.random.PRNGKey(0)
    k_params, k_x = jax.random.split(key)

    batch, input_dim, n_action = 8, 8, 4   # input_dim = (*input_dim,) of the module
    params = init_params(k_params, input_dim, n_action)
    prepped = prepare_params(params)
    x = jax.random.normal(k_x, (batch, input_dim), jnp.float32)

    out = reinforce_policy_forward(x, prepped)
    out = jax.block_until_ready(out)

    ref = reference_forward(x, params)
    assert out.shape == (batch, n_action)
    # bf16 fc2/fc3 MXU inputs (f32 accumulation, f32 fc1) => ~1e-2 rel. error.
    assert jnp.allclose(out, ref, atol=5e-2, rtol=5e-2), "mismatch vs JAX reference"

    print("KERNEL_OK")
</pallas_src>

<mosaic_0001>
module attributes {stable_mosaic.version = 11 : i64} {
  func.func @_mlp_kernel(%arg0: i32, %arg1: memref<8x8xf32, #tpu.memory_space<vmem>>, %arg2: memref<8x128xf32, #tpu.memory_space<vmem>>, %arg3: memref<1x128xf32, #tpu.memory_space<vmem>>, %arg4: memref<128x128xbf16, #tpu.memory_space<vmem>>, %arg5: memref<1x128xf32, #tpu.memory_space<vmem>>, %arg6: memref<128x4xbf16, #tpu.memory_space<vmem>>, %arg7: memref<1x4xf32, #tpu.memory_space<vmem>>, %arg8: memref<8x4xf32, #tpu.memory_space<vmem>>) attributes {dimension_semantics = [#tpu.dimension_semantics<parallel>], iteration_bounds = array<i64: 1>, scalar_prefetch = 0 : i64, scratch_operands = 0 : i64, tpu.core_type = #tpu.core_type<tc>, window_params = [{transform_indices = @transform_0, window_bounds = array<i64: 8, 8>}, {pipeline_mode = #tpu.pipeline_mode<synchronous>, transform_indices = @transform_1, window_bounds = array<i64: 8, 128>}, {pipeline_mode = #tpu.pipeline_mode<synchronous>, transform_indices = @transform_2, window_bounds = array<i64: 1, 128>}, {pipeline_mode = #tpu.pipeline_mode<synchronous>, transform_indices = @transform_3, window_bounds = array<i64: 128, 128>}, {pipeline_mode = #tpu.pipeline_mode<synchronous>, transform_indices = @transform_4, window_bounds = array<i64: 1, 128>}, {pipeline_mode = #tpu.pipeline_mode<synchronous>, transform_indices = @transform_5, window_bounds = array<i64: 128, 4>}, {pipeline_mode = #tpu.pipeline_mode<synchronous>, transform_indices = @transform_6, window_bounds = array<i64: 1, 4>}, {transform_indices = @transform_7, window_bounds = array<i64: 8, 4>}]} {
    %c0 = arith.constant 0 : index
    %c0_0 = arith.constant 0 : index
    %0 = vector.load %arg1[%c0, %c0_0] : memref<8x8xf32, #tpu.memory_space<vmem>>, vector<8x8xf32>
    %c0_1 = arith.constant 0 : index
    %c0_2 = arith.constant 0 : index
    %1 = vector.load %arg2[%c0_1, %c0_2] : memref<8x128xf32, #tpu.memory_space<vmem>>, vector<8x128xf32>
    %cst = arith.constant dense<0.000000e+00> : vector<8x128xf32>
    %2 = tpu.matmul %0, %1, %cst {dimension_numbers = #tpu.dot_dimension_numbers<[1], [0], [0], [1], [0, 0, 1, 1], [], []>} : vector<8x8xf32>, vector<8x128xf32>, vector<8x128xf32> -> vector<8x128xf32>
    %c0_3 = arith.constant 0 : index
    %c0_4 = arith.constant 0 : index
    %3 = vector.load %arg3[%c0_3, %c0_4] : memref<1x128xf32, #tpu.memory_space<vmem>>, vector<1x128xf32>
    %4 = vector.broadcast %3 : vector<1x128xf32> to vector<8x128xf32>
    %5 = arith.addf %2, %4 : vector<8x128xf32>
    %cst_5 = arith.constant 0.000000e+00 : f32
    %6 = vector.broadcast %cst_5 : f32 to vector<8x128xf32>
    %7 = arith.maximumf %5, %6 : vector<8x128xf32>
    %8 = arith.truncf %7 : vector<8x128xf32> to vector<8x128xbf16>
    %c0_6 = arith.constant 0 : index
    %c0_7 = arith.constant 0 : index
    %9 = vector.load %arg4[%c0_6, %c0_7] : memref<128x128xbf16, #tpu.memory_space<vmem>>, vector<128x128xbf16>
    %cst_8 = arith.constant dense<0.000000e+00> : vector<8x128xf32>
    %10 = tpu.matmul %8, %9, %cst_8 {dimension_numbers = #tpu.dot_dimension_numbers<[1], [0], [0], [1], [0, 0, 1, 1], [], []>} : vector<8x128xbf16>, vector<128x128xbf16>, vector<8x128xf32> -> vector<8x128xf32>
    %c0_9 = arith.constant 0 : index
    %c0_10 = arith.constant 0 : index
    %11 = vector.load %arg5[%c0_9, %c0_10] : memref<1x128xf32, #tpu.memory_space<vmem>>, vector<1x128xf32>
    %12 = vector.broadcast %11 : vector<1x128xf32> to vector<8x128xf32>
    %13 = arith.addf %10, %12 : vector<8x128xf32>
    %cst_11 = arith.constant 0.000000e+00 : f32
    %14 = vector.broadcast %cst_11 : f32 to vector<8x128xf32>
    %15 = arith.maximumf %13, %14 : vector<8x128xf32>
    %16 = arith.truncf %15 : vector<8x128xf32> to vector<8x128xbf16>
    %c0_12 = arith.constant 0 : index
    %c0_13 = arith.constant 0 : index
    %17 = vector.load %arg6[%c0_12, %c0_13] : memref<128x4xbf16, #tpu.memory_space<vmem>>, vector<128x4xbf16>
    %cst_14 = arith.constant dense<0.000000e+00> : vector<8x4xf32>
    %18 = tpu.matmul %16, %17, %cst_14 {dimension_numbers = #tpu.dot_dimension_numbers<[1], [0], [0], [1], [0, 0, 1, 1], [], []>} : vector<8x128xbf16>, vector<128x4xbf16>, vector<8x4xf32> -> vector<8x4xf32>
    %c0_15 = arith.constant 0 : index
    %c0_16 = arith.constant 0 : index
    %19 = vector.load %arg7[%c0_15, %c0_16] : memref<1x4xf32, #tpu.memory_space<vmem>>, vector<1x4xf32>
    %20 = vector.broadcast %19 : vector<1x4xf32> to vector<8x4xf32>
    %21 = arith.addf %18, %20 : vector<8x4xf32>
    %c0_17 = arith.constant 0 : index
    %c0_18 = arith.constant 0 : index
    %22 = vector.load %arg8[%c0_17, %c0_18] : memref<8x4xf32, #tpu.memory_space<vmem>>, vector<8x4xf32>
    tpu.vector_store %arg8[%c0_17, %c0_18], %21 {strides = array<i32>} : memref<8x4xf32, #tpu.memory_space<vmem>>, vector<8x4xf32>,
    return
  }
  func.func @transform_0(%arg0: i32) -> (i32, i32) {
    %c0_i32 = arith.constant 0 : i32
    %c0_i32_0 = arith.constant 0 : i32
    return %arg0, %c0_i32 : i32, i32
  }
  func.func @transform_1(%arg0: i32) -> (i32, i32) {
    %c0_i32 = arith.constant 0 : i32
    %c0_i32_0 = arith.constant 0 : i32
    %c0_i32_1 = arith.constant 0 : i32
    return %c0_i32, %c0_i32_0 : i32, i32
  }
  func.func @transform_2(%arg0: i32) -> (i32, i32) {
    %c0_i32 = arith.constant 0 : i32
    %c0_i32_0 = arith.constant 0 : i32
    %c0_i32_1 = arith.constant 0 : i32
    return %c0_i32, %c0_i32_0 : i32, i32
  }
  func.func @transform_3(%arg0: i32) -> (i32, i32) {
    %c0_i32 = arith.constant 0 : i32
    %c0_i32_0 = arith.constant 0 : i32
    %c0_i32_1 = arith.constant 0 : i32
    return %c0_i32, %c0_i32_0 : i32, i32
  }
  func.func @transform_4(%arg0: i32) -> (i32, i32) {
    %c0_i32 = arith.constant 0 : i32
    %c0_i32_0 = arith.constant 0 : i32
    %c0_i32_1 = arith.constant 0 : i32
    return %c0_i32, %c0_i32_0 : i32, i32
  }
  func.func @transform_5(%arg0: i32) -> (i32, i32) {
    %c0_i32 = arith.constant 0 : i32
    %c0_i32_0 = arith.constant 0 : i32
    %c0_i32_1 = arith.constant 0 : i32
    return %c0_i32, %c0_i32_0 : i32, i32
  }
  func.func @transform_6(%arg0: i32) -> (i32, i32) {
    %c0_i32 = arith.constant 0 : i32
    %c0_i32_0 = arith.constant 0 : i32
    %c0_i32_1 = arith.constant 0 : i32
    return %c0_i32, %c0_i32_0 : i32, i32
  }
  func.func @transform_7(%arg0: i32) -> (i32, i32) {
    %c0_i32 = arith.constant 0 : i32
    %c0_i32_0 = arith.constant 0 : i32
    return %arg0, %c0_i32 : i32, i32
  }
}

</mosaic_0001>

<llo_original>
// kernel: reinforce_policy_forward.1
$region0: #{reinforce_policy_forward.1}
  #allocation0 [shape = 'u32[]', space=smem, size = 0x4, offset = 0x4, fixed_abs, tag = 'smem constant byte address 0x4 - core index']
  #allocation1 [shape = 'u32[144,128]{1,0:T(1,128)}', space=vmem, size = 0x12000, scoped, tag = 'internal scratch']
  %s0 = inlined_call_operand.vmem [shape: f32[8,8], index: 0, kind: input, shape index: {}]
  %s1 = inlined_call_operand.vmem [shape: f32[8,128], index: 1, kind: input, shape index: {}]
  %s2 = inlined_call_operand.vmem [shape: f32[1,128], index: 2, kind: input, shape index: {}]
  %s3 = inlined_call_operand.vmem [shape: bf16[128,128], index: 3, kind: input, shape index: {}]
  %s4 = inlined_call_operand.vmem [shape: f32[1,128], index: 4, kind: input, shape index: {}]
  %s5 = inlined_call_operand.vmem [shape: bf16[128,4], index: 5, kind: input, shape index: {}]
  %s6 = inlined_call_operand.vmem [shape: f32[1,4], index: 6, kind: input, shape index: {}]
  %s7 = inlined_call_operand.vmem [shape: f32[8,4], index: 7, kind: output, shape index: {}]
  %s8 = sld [smem:[#allocation0]]
  $region38: #{reinforce_policy_forward.1} parent=0
    _
  %s10 = ssub.s32 1, %s8
  %s11 = scalar_select 0, %s10, %s8
  // Predicated region
  $region2: #{reinforce_policy_forward.1} parent=0 // pred_check
    _
  $region3: #{reinforce_policy_forward.1} parent=0 // pred_check_branch
    %13 = sbr.rel (0) target = $region5
  $region4: #{reinforce_policy_forward.1} parent=0 // pred_region
    _
  $region5: #{reinforce_policy_forward.1} parent=0 // pred_fallthru
    _
  // Predicated region
  $region6: #{reinforce_policy_forward.1} parent=0 // pred_check
    _
  $region7: #{reinforce_policy_forward.1} parent=0 // pred_check_branch
    %15 = sbr.rel (0) target = $region9
  $region8: #{reinforce_policy_forward.1} parent=0 // pred_region
    _
  $region9: #{reinforce_policy_forward.1} parent=0 // pred_fallthru
    _
  // Predicated region
  $region10: #{reinforce_policy_forward.1} parent=0 // pred_check
    _
  $region11: #{reinforce_policy_forward.1} parent=0 // pred_check_branch
    %17 = sbr.rel (0) target = $region13
  $region12: #{reinforce_policy_forward.1} parent=0 // pred_region
    _
  $region13: #{reinforce_policy_forward.1} parent=0 // pred_fallthru
    _
  // Predicated region
  $region14: #{reinforce_policy_forward.1} parent=0 // pred_check
    _
  $region15: #{reinforce_policy_forward.1} parent=0 // pred_check_branch
    %19 = sbr.rel (0) target = $region17
  $region16: #{reinforce_policy_forward.1} parent=0 // pred_region
    _
  $region17: #{reinforce_policy_forward.1} parent=0 // pred_fallthru
    _
  // Predicated region
  $region18: #{reinforce_policy_forward.1} parent=0 // pred_check
    _
  $region19: #{reinforce_policy_forward.1} parent=0 // pred_check_branch
    %21 = sbr.rel (0) target = $region21
  $region20: #{reinforce_policy_forward.1} parent=0 // pred_region
    _
  $region21: #{reinforce_policy_forward.1} parent=0 // pred_fallthru
    _
  // Predicated region
  $region22: #{reinforce_policy_forward.1} parent=0 // pred_check
    _
  $region23: #{reinforce_policy_forward.1} parent=0 // pred_check_branch
    %23 = sbr.rel (0) target = $region25
  $region24: #{reinforce_policy_forward.1} parent=0 // pred_region
    _
  $region25: #{reinforce_policy_forward.1} parent=0 // pred_fallthru
    _
  // Predicated region
  $region26: #{reinforce_policy_forward.1} parent=0 // pred_check
    _
  $region27: #{reinforce_policy_forward.1} parent=0 // pred_check_branch
    %25 = sbr.rel (0) target = $region29
  $region28: #{reinforce_policy_forward.1} parent=0 // pred_region
    _
  $region29: #{reinforce_policy_forward.1} parent=0 // pred_fallthru
    _
  %v27 = vld [vmem:[%s0] sm:$0xff]
  %v28 = vld [vmem:[%s1] sm:$0xff]
  %v29 = vld [vmem:[%s2] sm:$0x1]
  %v31 = vlaneseq
  %v32 = vshrl.u32 %v31, 7
  %v33 = vsub.s32 0, %v32
  %v34 = vrot.slane %v29, %v33
  %vm36 = vcmask 64512
  %v38 = vsel %vm36, %v27, 0
  %40 = vmatprep.subr.mxu0 0.0
  %41 = vmatpush1.msra.mxu0 %v28
  %42 = vmatprep.subr.mxu0 0.0
  %43 = vmatpush1.msra.mxu0 0.0
  %44 = vmatprep.subr.mxu0 0.0
  %45 = vmatpush1.msra.mxu0 0.0
  %46 = vmatprep.subr.mxu0 0.0
  %47 = vmatpush1.msra.mxu0 0.0
  %48 = vmatprep.subr.mxu0 0.0
  %49 = vmatpush1.msra.mxu0 0.0
  %50 = vmatprep.subr.mxu0 0.0
  %51 = vmatpush1.msra.mxu0 0.0
  %52 = vmatprep.subr.mxu0 0.0
  %53 = vmatpush1.msra.mxu0 0.0
  %54 = vmatprep.subr.mxu0 0.0
  %55 = vmatpush1.msra.mxu0 0.0
  %56 = vmatprep.subr.mxu0 0.0
  %57 = vmatpush1.msra.mxu0 0.0
  %58 = vmatprep.subr.mxu0 0.0
  %59 = vmatpush1.msra.mxu0 0.0
  %60 = vmatprep.subr.mxu0 0.0
  %61 = vmatpush1.msra.mxu0 0.0
  %62 = vmatprep.subr.mxu0 0.0
  %63 = vmatpush1.msra.mxu0 0.0
  %64 = vmatprep.subr.mxu0 0.0
  %65 = vmatpush1.msra.mxu0 0.0
  %66 = vmatprep.subr.mxu0 0.0
  %67 = vmatpush1.msra.mxu0 0.0
  %68 = vmatprep.subr.mxu0 0.0
  %69 = vmatpush1.msra.mxu0 0.0
  %70 = vmatprep.subr.mxu0 0.0
  %71 = vmatpush1.msra.mxu0 0.0
  %72 = vmatprep.subr.mxu0 0.0
  %73 = vmatpush1.msra.mxu0 0.0
  %74 = vmatprep.subr.mxu0 0.0
  %75 = vmatpush1.msra.mxu0 0.0
  %76 = vmatprep.subr.mxu0 0.0
  %77 = vmatpush1.msra.mxu0 0.0
  %78 = vmatprep.subr.mxu0 0.0
  %79 = vmatpush1.msra.mxu0 0.0
  %80 = vmatprep.subr.mxu0 0.0
  %81 = vmatpush1.msra.mxu0 0.0
  %82 = vmatprep.subr.mxu0 0.0
  %83 = vmatpush1.msra.mxu0 0.0
  %84 = vmatprep.subr.mxu0 0.0
  %85 = vmatpush1.msra.mxu0 0.0
  %86 = vmatprep.subr.mxu0 0.0
  %87 = vmatpush1.msra.mxu0 0.0
  %88 = vmatprep.subr.mxu0 0.0
  %89 = vmatpush1.msra.mxu0 0.0
  %90 = vmatprep.subr.mxu0 0.0
  %91 = vmatpush1.msra.mxu0 0.0
  %92 = vmatprep.subr.mxu0 0.0
  %93 = vmatpush1.msra.mxu0 0.0
  %94 = vmatprep.subr.mxu0 0.0
  %95 = vmatpush1.msra.mxu0 0.0
  %96 = vmatprep.subr.mxu0 0.0
  %97 = vmatpush1.msra.mxu0 0.0
  %98 = vmatprep.subr.mxu0 0.0
  %99 = vmatpush1.msra.mxu0 0.0
  %100 = vmatprep.subr.mxu0 0.0
  %101 = vmatpush1.msra.mxu0 0.0
  %102 = vmatprep.subr.mxu0 0.0
  %103 = vmatpush1.msra.mxu0 0.0
  %104 = vmatprep.mubr.f32.mxu0 0.0
  %105 = vmatmul.mubr.f32.gmra.mrb[0].mxu0 %v38
  %v106 = vpop.f32.mrb[0].mxu0
  %v107 = vadd.f32 %v34, %v106
  %v108 = vpop.f32.mrb[0].mxu0
  %109 = vdwg.mxu0
  %v110 = vmax.f32 %v107, 0.0
  %v111 = vpack.c.bf16 %v110, %v110
  %v112 = vld [vmem:[%s3] sm:$0xf]
  %v113 = vld [vmem:[%s3 + $0x4] sm:$0xf]
  %v114 = vld [vmem:[%s3 + $0x8] sm:$0xf]
  %v115 = vld [vmem:[%s3 + $0xc] sm:$0xf]
  %v116 = vld [vmem:[%s3 + $0x10] sm:$0xf]
  %v117 = vld [vmem:[%s3 + $0x14] sm:$0xf]
  %v118 = vld [vmem:[%s3 + $0x18] sm:$0xf]
  %v119 = vld [vmem:[%s3 + $0x1c] sm:$0xf]
  %v120 = vld [vmem:[%s3 + $0x20] sm:$0xf]
  %v121 = vld [vmem:[%s3 + $0x24] sm:$0xf]
  %v122 = vld [vmem:[%s3 + $0x28] sm:$0xf]
  %v123 = vld [vmem:[%s3 + $0x2c] sm:$0xf]
  %v124 = vld [vmem:[%s3 + $0x30] sm:$0xf]
  %v125 = vld [vmem:[%s3 + $0x34] sm:$0xf]
  %v126 = vld [vmem:[%s3 + $0x38] sm:$0xf]
  %v127 = vld [vmem:[%s3 + $0x3c] sm:$0xf]
  %v128 = vld [vmem:[%s4] sm:$0x1]
  %v130 = vlaneseq
  %v131 = vshrl.u32 %v130, 7
  %v132 = vsub.s32 0, %v131
  %v133 = vrot.slane %v128, %v132
  %v151 = vunpack.c.l.b16 %v112
  %v152 = vunpack.c.l.b16 %v113
  %v153 = vunpack.c.l.b16 %v114
  %v154 = vunpack.c.l.b16 %v115
  %v155 = vunpack.c.l.b16 %v116
  %v156 = vunpack.c.l.b16 %v117
  %v157 = vunpack.c.l.b16 %v118
  %v158 = vunpack.c.l.b16 %v119
  %v159 = vunpack.c.l.b16 %v120
  %v160 = vunpack.c.l.b16 %v121
  %v161 = vunpack.c.l.b16 %v122
  %v162 = vunpack.c.l.b16 %v123
  %v163 = vunpack.c.l.b16 %v124
  %v164 = vunpack.c.l.b16 %v125
  %v165 = vunpack.c.l.b16 %v126
  %v166 = vunpack.c.l.b16 %v127
  %v167 = vpack.c.b16 %v152, %v151
  %v168 = vpack.c.b16 %v154, %v153
  %v169 = vpack.c.b16 %v156, %v155
  %v170 = vpack.c.b16 %v158, %v157
  %v171 = vpack.c.b16 %v160, %v159
  %v172 = vpack.c.b16 %v162, %v161
  %v173 = vpack.c.b16 %v164, %v163
  %v174 = vpack.c.b16 %v166, %v165
  %183 = vmatprep.subr.bf16.mxu0 0
  %184 = vmatpush1.bf16.msra.mxu0 %v167
  %185 = vmatprep.subr.bf16.mxu0 0
  %186 = vmatpush1.bf16.msra.mxu0 %v168
  %187 = vmatprep.subr.bf16.mxu0 0
  %188 = vmatpush1.bf16.msra.mxu0 %v169
  %189 = vmatprep.subr.bf16.mxu0 0
  %190 = vmatpush1.bf16.msra.mxu0 %v170
  %191 = vmatprep.subr.bf16.mxu0 0
  %192 = vmatpush1.bf16.msra.mxu0 %v171
  %193 = vmatprep.subr.bf16.mxu0 0
  %194 = vmatpush1.bf16.msra.mxu0 %v172
  %195 = vmatprep.subr.bf16.mxu0 0
  %196 = vmatpush1.bf16.msra.mxu0 %v173
  %197 = vmatprep.subr.bf16.mxu0 0
  %198 = vmatpush1.bf16.msra.mxu0 %v174
  %199 = vmatprep.subr.bf16.mxu0 0
  %200 = vmatpush1.bf16.msra.mxu0 0
  %201 = vmatprep.subr.bf16.mxu0 0
  %202 = vmatpush1.bf16.msra.mxu0 0
  %203 = vmatprep.subr.bf16.mxu0 0
  %204 = vmatpush1.bf16.msra.mxu0 0
  %205 = vmatprep.subr.bf16.mxu0 0
  %206 = vmatpush1.bf16.msra.mxu0 0
  %207 = vmatprep.subr.bf16.mxu0 0
  %208 = vmatpush1.bf16.msra.mxu0 0
  %209 = vmatprep.subr.bf16.mxu0 0
  %210 = vmatpush1.bf16.msra.mxu0 0
  %211 = vmatprep.subr.bf16.mxu0 0
  %212 = vmatpush1.bf16.msra.mxu0 0
  %213 = vmatprep.subr.bf16.mxu0 0
  %214 = vmatpush1.bf16.msra.mxu0 0
  %215 = vmatprep.mubr.bf16.mxu0 0
  %216 = vmatmul.mubr.bf16.gmra.mrb[0].mxu0 %v111
  %v217 = vpop.f32.mrb[0].mxu0
  %v218 = vadd.f32 %v133, %v217
  %v219 = vpop.f32.mrb[0].mxu0
  %v220 = vpop.f32.mrb[0].mxu0
  %v221 = vpop.f32.mrb[0].mxu0
  %222 = vdwg.mxu0
  %v223 = vmax.f32 %v218, 0.0
  %v224 = vpack.c.bf16 %v223, %v223
  %v225 = vld [vmem:[%s5] sm:$0xf]
  %v226 = vld [vmem:[%s5 + $0x4] sm:$0xf]
  %v227 = vld [vmem:[%s5 + $0x8] sm:$0xf]
  %v228 = vld [vmem:[%s5 + $0xc] sm:$0xf]
  %v229 = vld [vmem:[%s5 + $0x10] sm:$0xf]
  %v230 = vld [vmem:[%s5 + $0x14] sm:$0xf]
  %v231 = vld [vmem:[%s5 + $0x18] sm:$0xf]
  %v232 = vld [vmem:[%s5 + $0x1c] sm:$0xf]
  %v233 = vld [vmem:[%s5 + $0x20] sm:$0xf]
  %v234 = vld [vmem:[%s5 + $0x24] sm:$0xf]
  %v235 = vld [vmem:[%s5 + $0x28] sm:$0xf]
  %v236 = vld [vmem:[%s5 + $0x2c] sm:$0xf]
  %v237 = vld [vmem:[%s5 + $0x30] sm:$0xf]
  %v238 = vld [vmem:[%s5 + $0x34] sm:$0xf]
  %v239 = vld [vmem:[%s5 + $0x38] sm:$0xf]
  %v240 = vld [vmem:[%s5 + $0x3c] sm:$0xf]
  %v241 = vld [vmem:[%s6] sm:$0x1]
  %v243 = vlaneseq
  %v244 = vshrl.u32 %v243, 7
  %v245 = vsub.s32 0, %v244
  %v246 = vrot.slane %v241, %v245
  %v264 = vunpack.c.l.b16 %v225
  %v265 = vunpack.c.l.b16 %v226
  %v266 = vunpack.c.l.b16 %v227
  %v267 = vunpack.c.l.b16 %v228
  %v268 = vunpack.c.l.b16 %v229
  %v269 = vunpack.c.l.b16 %v230
  %v270 = vunpack.c.l.b16 %v231
  %v271 = vunpack.c.l.b16 %v232
  %v272 = vunpack.c.l.b16 %v233
  %v273 = vunpack.c.l.b16 %v234
  %v274 = vunpack.c.l.b16 %v235
  %v275 = vunpack.c.l.b16 %v236
  %v276 = vunpack.c.l.b16 %v237
  %v277 = vunpack.c.l.b16 %v238
  %v278 = vunpack.c.l.b16 %v239
  %v279 = vunpack.c.l.b16 %v240
  %v280 = vpack.c.b16 %v265, %v264
  %v281 = vpack.c.b16 %v267, %v266
  %v282 = vpack.c.b16 %v269, %v268
  %v283 = vpack.c.b16 %v271, %v270
  %v284 = vpack.c.b16 %v273, %v272
  %v285 = vpack.c.b16 %v275, %v274
  %v286 = vpack.c.b16 %v277, %v276
  %v287 = vpack.c.b16 %v279, %v278
  %296 = vmatprep.subr.bf16.mxu0 0
  %297 = vmatpush1.bf16.msra.mxu0 %v280
  %298 = vmatprep.subr.bf16.mxu0 0
  %299 = vmatpush1.bf16.msra.mxu0 %v281
  %300 = vmatprep.subr.bf16.mxu0 0
  %301 = vmatpush1.bf16.msra.mxu0 %v282
  %302 = vmatprep.subr.bf16.mxu0 0
  %303 = vmatpush1.bf16.msra.mxu0 %v283
  %304 = vmatprep.subr.bf16.mxu0 0
  %305 = vmatpush1.bf16.msra.mxu0 %v284
  %306 = vmatprep.subr.bf16.mxu0 0
  %307 = vmatpush1.bf16.msra.mxu0 %v285
  %308 = vmatprep.subr.bf16.mxu0 0
  %309 = vmatpush1.bf16.msra.mxu0 %v286
  %310 = vmatprep.subr.bf16.mxu0 0
  %311 = vmatpush1.bf16.msra.mxu0 %v287
  %312 = vmatprep.subr.bf16.mxu0 0
  %313 = vmatpush1.bf16.msra.mxu0 0
  %314 = vmatprep.subr.bf16.mxu0 0
  %315 = vmatpush1.bf16.msra.mxu0 0
  %316 = vmatprep.subr.bf16.mxu0 0
  %317 = vmatpush1.bf16.msra.mxu0 0
  %318 = vmatprep.subr.bf16.mxu0 0
  %319 = vmatpush1.bf16.msra.mxu0 0
  %320 = vmatprep.subr.bf16.mxu0 0
  %321 = vmatpush1.bf16.msra.mxu0 0
  %322 = vmatprep.subr.bf16.mxu0 0
  %323 = vmatpush1.bf16.msra.mxu0 0
  %324 = vmatprep.subr.bf16.mxu0 0
  %325 = vmatpush1.bf16.msra.mxu0 0
  %326 = vmatprep.subr.bf16.mxu0 0
  %327 = vmatpush1.bf16.msra.mxu0 0
  %328 = vmatprep.mubr.bf16.mxu0 0
  %329 = vmatmul.mubr.bf16.gmra.mrb[0].mxu0 %v224
  %v330 = vpop.f32.mrb[0].mxu0
  %v331 = vadd.f32 %v246, %v330
  %v332 = vpop.f32.mrb[0].mxu0
  %v333 = vpop.f32.mrb[0].mxu0
  %v334 = vpop.f32.mrb[0].mxu0
  %335 = vdwg.mxu0
  %vm336 = vcmask 31744
  %337 = vst.msk [vmem:[%s7] sm:$0xff] %vm336, %v331
  // Predicated region
  $region30: #{reinforce_policy_forward.1} parent=0 // pred_check
    _
  $region31: #{reinforce_policy_forward.1} parent=0 // pred_check_branch
    %339 = sbr.rel (0) target = $region33
  $region32: #{reinforce_policy_forward.1} parent=0 // pred_region
    _
  $region33: #{reinforce_policy_forward.1} parent=0 // pred_fallthru
    _
  // Predicated region
  $region34: #{reinforce_policy_forward.1} parent=0 // pred_check
    _
  $region35: #{reinforce_policy_forward.1} parent=0 // pred_check_branch
    %341 = sbr.rel (0) target = $region37
  $region36: #{reinforce_policy_forward.1} parent=0 // pred_region
    _
  $region37: #{reinforce_policy_forward.1} parent=0 // pred_fallthru
    _

</llo_original>
